<compile_context>
chip_gen: v7x
topology: tpu7x:2x2x1
jax: 0.10.0
libtpu: 0.0.40
codegen_flags: <defaults>
</compile_context>

<pallas_src>
import jax
import jax.numpy as jnp
from jax.experimental import pallas as pl
from jax.experimental.pallas import tpu as pltpu


def _round_up(x, m):
    return (x + m - 1) // m * m


def _fused_kernel(w1_ref, b1_ref, w2_ref, b2_ref, x_ref, o_ref):
    # w1_ref: (Cin, Cout) f32 in SMEM (BN already folded in), b1_ref: (Cout,) SMEM
    # w2_ref: (Cout, Cin) f32 in SMEM (torch Conv2d layout),   b2_ref: (Cout,) SMEM
    # x_ref / o_ref: (1, C, R, 128) f32 pixel planes in VMEM (lane-dense).
    C = w2_ref.shape[0]

    # Per-input-channel pixel planes, each (R, 128) -> full vreg occupancy.
    xs = [x_ref[0, i] for i in range(C)]

    # Layer 1 (ConvTranspose 1x1 with folded BN) + ReLU: unrolled VPU FMAs.
    hs = []
    for o in range(C):
        acc = xs[0] * w1_ref[0, o]
        for i in range(1, C):
            acc = acc + xs[i] * w1_ref[i, o]
        hs.append(jnp.maximum(acc + b1_ref[o], 0.0))

    # Layer 2 (Conv 1x1): unrolled VPU FMAs, lane-dense per-channel stores.
    for c in range(C):
        acc = hs[0] * w2_ref[c, 0]
        for o in range(1, C):
            acc = acc + hs[o] * w2_ref[c, o]
        o_ref[0, c] = acc + b2_ref[c]


def scale_eq_convtranspose_relu_net(x_nchw, params, *, tile_rows=16):
    """x_nchw: (N, 3, H, W) float32. Returns (N, 3, H, W) float32.

    tile_rows: sublane rows of 128 pixels per grid step (16 -> 2048 pixels/step),
               small enough to fit v7x's 32 MiB scoped VMEM with double-buffering.
    """
    assert tile_rows % 8 == 0
    N, C, H, W = x_nchw.shape
    w1, b1, gamma, beta, rmean, rvar, w2, b2, eps = params

    # Fold BatchNorm (eval mode) + first bias into the first weight at trace time.
    bn_scale = gamma / jnp.sqrt(rvar + eps)            # (C,)
    bn_shift = beta - rmean * bn_scale                 # (C,)
    w1f = (w1 * bn_scale[None, :]).astype(jnp.float32)  # (Cin, Cout)
    b1f = (b1 * bn_scale + bn_shift).astype(jnp.float32)

    # NCHW -> channel planes (N, C, rows, 128): pure reshapes, no transpose.
    HW = H * W
    rows = pl.cdiv(HW, 128)
    if rows > tile_rows:
        R = tile_rows
        rows = _round_up(rows, R)
    else:
        R = rows  # full-extent block along sublane dim (valid even if not %8)
    HWp = rows * 128

    x3 = x_nchw.reshape(N, C, HW)
    if HWp != HW:
        x3 = jnp.pad(x3, ((0, 0), (0, 0), (0, HWp - HW)))
    x4 = x3.reshape(N, C, rows, 128)

    grid = (N, rows // R)
    smem_spec = pl.BlockSpec(memory_space=pltpu.MemorySpace.SMEM)

    out4 = pl.pallas_call(
        _fused_kernel,
        out_shape=jax.ShapeDtypeStruct((N, C, rows, 128), jnp.float32),
        grid=grid,
        in_specs=[
            smem_spec,                                            # W1 folded (Cin, Cout)
            smem_spec,                                            # b1 folded (C,)
            smem_spec,                                            # W2 (Cout, Cin)
            smem_spec,                                            # b2 (C,)
            pl.BlockSpec((1, C, R, 128), lambda n, j: (n, 0, j, 0)),  # x planes
        ],
        out_specs=pl.BlockSpec((1, C, R, 128), lambda n, j: (n, 0, j, 0)),
        compiler_params=pltpu.CompilerParams(
            dimension_semantics=("parallel", "parallel")),
    )(w1f, b1f, w2, b2, x4)

    out = out4.reshape(N, C, HWp)
    if HWp != HW:
        out = out[:, :, :HW]
    return out.reshape(N, C, H, W)


def make_params(key, C=3, eps=1e-5):
    ks = jax.random.split(key, 5)
    # ConvTranspose2d weight: torch shape (in, out, 1, 1) -> matrix (in, out)
    w1 = jax.random.normal(ks[0], (C, C), jnp.float32) * 0.5
    b1 = jax.random.normal(ks[1], (C,), jnp.float32) * 0.1
    # Conv2d weight: torch shape (out, in, 1, 1) -> matrix (out, in)
    w2 = jax.random.normal(ks[2], (C, C), jnp.float32) * 0.5
    b2 = jax.random.normal(ks[3], (C,), jnp.float32) * 0.1
    # BatchNorm: gamma = 10 * rand (bn_weight_change), beta = 0,
    # eval-mode running stats (mean 0, var 1).
    gamma = 10.0 * jax.random.uniform(ks[4], (C,), jnp.float32)
    beta = jnp.zeros((C,), jnp.float32)
    rmean = jnp.zeros((C,), jnp.float32)
    rvar = jnp.ones((C,), jnp.float32)
    return w1, b1, gamma, beta, rmean, rvar, w2, b2, eps


def _reference(x_nchw, params):
    # Un-fused reference: convtranspose(1x1) -> BN(eval) -> relu -> conv(1x1).
    w1, b1, gamma, beta, rmean, rvar, w2, b2, eps = params
    N, C, H, W = x_nchw.shape
    xf = jnp.transpose(x_nchw, (0, 2, 3, 1)).reshape(-1, C)
    h = xf @ w1 + b1
    h = (h - rmean) / jnp.sqrt(rvar + eps) * gamma + beta
    h = jnp.maximum(h, 0.0)
    of = h @ w2.T + b2
    return jnp.transpose(of.reshape(N, H, W, C), (0, 3, 1, 2))


if __name__ == "__main__":
    key = jax.random.PRNGKey(0)
    kx, kp = jax.random.split(key)

    N, C, H, W = 2, 3, 16, 16
    x = jax.random.normal(kx, (N, C, H, W), jnp.float32)
    params = make_params(kp, C=C)

    out = scale_eq_convtranspose_relu_net(x, params)
    out = jax.block_until_ready(out)

    ref = _reference(x, params)
    assert out.shape == (N, C, H, W)
    assert jnp.allclose(out, ref, atol=1e-4, rtol=1e-4)

    print("KERNEL_OK")
</pallas_src>

<mosaic_0001>
module attributes {stable_mosaic.version = 11 : i64} {
  func.func @_fused_kernel(%arg0: i32, %arg1: i32, %arg2: memref<3x3xf32, #tpu.memory_space<smem>>, %arg3: memref<3xf32, #tpu.memory_space<smem>>, %arg4: memref<3x3xf32, #tpu.memory_space<smem>>, %arg5: memref<3xf32, #tpu.memory_space<smem>>, %arg6: memref<1x3x2x128xf32, #tpu.memory_space<vmem>>, %arg7: memref<1x3x2x128xf32, #tpu.memory_space<vmem>>) attributes {dimension_semantics = [#tpu.dimension_semantics<parallel>, #tpu.dimension_semantics<parallel>], iteration_bounds = array<i64: 2, 1>, scalar_prefetch = 0 : i64, scratch_operands = 0 : i64, tpu.core_type = #tpu.core_type<tc>, window_params = [{transform_indices = @transform_0, window_bounds = array<i64: 3, 3>}, {transform_indices = @transform_1, window_bounds = array<i64: 3>}, {transform_indices = @transform_2, window_bounds = array<i64: 3, 3>}, {transform_indices = @transform_3, window_bounds = array<i64: 3>}, {transform_indices = @transform_4, window_bounds = array<i64: 1, 3, 2, 128>}, {transform_indices = @transform_5, window_bounds = array<i64: 1, 3, 2, 128>}]} {
    %c0 = arith.constant 0 : index
    %c0_0 = arith.constant 0 : index
    %c0_1 = arith.constant 0 : index
    %c0_2 = arith.constant 0 : index
    %0 = vector.load %arg6[%c0, %c0_0, %c0_1, %c0_2] : memref<1x3x2x128xf32, #tpu.memory_space<vmem>>, vector<1x1x2x128xf32>
    %1 = vector.shape_cast %0 : vector<1x1x2x128xf32> to vector<2x128xf32>
    %c0_3 = arith.constant 0 : index
    %c1 = arith.constant 1 : index
    %c0_4 = arith.constant 0 : index
    %c0_5 = arith.constant 0 : index
    %2 = vector.load %arg6[%c0_3, %c1, %c0_4, %c0_5] : memref<1x3x2x128xf32, #tpu.memory_space<vmem>>, vector<1x1x2x128xf32>
    %3 = vector.shape_cast %2 : vector<1x1x2x128xf32> to vector<2x128xf32>
    %c0_6 = arith.constant 0 : index
    %c2 = arith.constant 2 : index
    %c0_7 = arith.constant 0 : index
    %c0_8 = arith.constant 0 : index
    %4 = vector.load %arg6[%c0_6, %c2, %c0_7, %c0_8] : memref<1x3x2x128xf32, #tpu.memory_space<vmem>>, vector<1x1x2x128xf32>
    %5 = vector.shape_cast %4 : vector<1x1x2x128xf32> to vector<2x128xf32>
    %c0_9 = arith.constant 0 : index
    %c0_10 = arith.constant 0 : index
    %6 = memref.load %arg2[%c0_9, %c0_10] : memref<3x3xf32, #tpu.memory_space<smem>>
    %7 = vector.broadcast %6 : f32 to vector<2x128xf32>
    %8 = arith.mulf %1, %7 : vector<2x128xf32>
    %c1_11 = arith.constant 1 : index
    %c0_12 = arith.constant 0 : index
    %9 = memref.load %arg2[%c1_11, %c0_12] : memref<3x3xf32, #tpu.memory_space<smem>>
    %10 = vector.broadcast %9 : f32 to vector<2x128xf32>
    %11 = arith.mulf %3, %10 : vector<2x128xf32>
    %12 = arith.addf %8, %11 : vector<2x128xf32>
    %c2_13 = arith.constant 2 : index
    %c0_14 = arith.constant 0 : index
    %13 = memref.load %arg2[%c2_13, %c0_14] : memref<3x3xf32, #tpu.memory_space<smem>>
    %14 = vector.broadcast %13 : f32 to vector<2x128xf32>
    %15 = arith.mulf %5, %14 : vector<2x128xf32>
    %16 = arith.addf %12, %15 : vector<2x128xf32>
    %c0_15 = arith.constant 0 : index
    %17 = memref.load %arg3[%c0_15] : memref<3xf32, #tpu.memory_space<smem>>
    %18 = vector.broadcast %17 : f32 to vector<2x128xf32>
    %19 = arith.addf %16, %18 : vector<2x128xf32>
    %cst = arith.constant 0.000000e+00 : f32
    %20 = vector.broadcast %cst : f32 to vector<2x128xf32>
    %21 = arith.maximumf %19, %20 : vector<2x128xf32>
    %c0_16 = arith.constant 0 : index
    %c1_17 = arith.constant 1 : index
    %22 = memref.load %arg2[%c0_16, %c1_17] : memref<3x3xf32, #tpu.memory_space<smem>>
    %23 = vector.broadcast %22 : f32 to vector<2x128xf32>
    %24 = arith.mulf %1, %23 : vector<2x128xf32>
    %c1_18 = arith.constant 1 : index
    %c1_19 = arith.constant 1 : index
    %25 = memref.load %arg2[%c1_18, %c1_19] : memref<3x3xf32, #tpu.memory_space<smem>>
    %26 = vector.broadcast %25 : f32 to vector<2x128xf32>
    %27 = arith.mulf %3, %26 : vector<2x128xf32>
    %28 = arith.addf %24, %27 : vector<2x128xf32>
    %c2_20 = arith.constant 2 : index
    %c1_21 = arith.constant 1 : index
    %29 = memref.load %arg2[%c2_20, %c1_21] : memref<3x3xf32, #tpu.memory_space<smem>>
    %30 = vector.broadcast %29 : f32 to vector<2x128xf32>
    %31 = arith.mulf %5, %30 : vector<2x128xf32>
    %32 = arith.addf %28, %31 : vector<2x128xf32>
    %c1_22 = arith.constant 1 : index
    %33 = memref.load %arg3[%c1_22] : memref<3xf32, #tpu.memory_space<smem>>
    %34 = vector.broadcast %33 : f32 to vector<2x128xf32>
    %35 = arith.addf %32, %34 : vector<2x128xf32>
    %cst_23 = arith.constant 0.000000e+00 : f32
    %36 = vector.broadcast %cst_23 : f32 to vector<2x128xf32>
    %37 = arith.maximumf %35, %36 : vector<2x128xf32>
    %c0_24 = arith.constant 0 : index
    %c2_25 = arith.constant 2 : index
    %38 = memref.load %arg2[%c0_24, %c2_25] : memref<3x3xf32, #tpu.memory_space<smem>>
    %39 = vector.broadcast %38 : f32 to vector<2x128xf32>
    %40 = arith.mulf %1, %39 : vector<2x128xf32>
    %c1_26 = arith.constant 1 : index
    %c2_27 = arith.constant 2 : index
    %41 = memref.load %arg2[%c1_26, %c2_27] : memref<3x3xf32, #tpu.memory_space<smem>>
    %42 = vector.broadcast %41 : f32 to vector<2x128xf32>
    %43 = arith.mulf %3, %42 : vector<2x128xf32>
    %44 = arith.addf %40, %43 : vector<2x128xf32>
    %c2_28 = arith.constant 2 : index
    %c2_29 = arith.constant 2 : index
    %45 = memref.load %arg2[%c2_28, %c2_29] : memref<3x3xf32, #tpu.memory_space<smem>>
    %46 = vector.broadcast %45 : f32 to vector<2x128xf32>
    %47 = arith.mulf %5, %46 : vector<2x128xf32>
    %48 = arith.addf %44, %47 : vector<2x128xf32>
    %c2_30 = arith.constant 2 : index
    %49 = memref.load %arg3[%c2_30] : memref<3xf32, #tpu.memory_space<smem>>
    %50 = vector.broadcast %49 : f32 to vector<2x128xf32>
    %51 = arith.addf %48, %50 : vector<2x128xf32>
    %cst_31 = arith.constant 0.000000e+00 : f32
    %52 = vector.broadcast %cst_31 : f32 to vector<2x128xf32>
    %53 = arith.maximumf %51, %52 : vector<2x128xf32>
    %c0_32 = arith.constant 0 : index
    %c0_33 = arith.constant 0 : index
    %54 = memref.load %arg4[%c0_32, %c0_33] : memref<3x3xf32, #tpu.memory_space<smem>>
    %55 = vector.broadcast %54 : f32 to vector<2x128xf32>
    %56 = arith.mulf %21, %55 : vector<2x128xf32>
    %c0_34 = arith.constant 0 : index
    %c1_35 = arith.constant 1 : index
    %57 = memref.load %arg4[%c0_34, %c1_35] : memref<3x3xf32, #tpu.memory_space<smem>>
    %58 = vector.broadcast %57 : f32 to vector<2x128xf32>
    %59 = arith.mulf %37, %58 : vector<2x128xf32>
    %60 = arith.addf %56, %59 : vector<2x128xf32>
    %c0_36 = arith.constant 0 : index
    %c2_37 = arith.constant 2 : index
    %61 = memref.load %arg4[%c0_36, %c2_37] : memref<3x3xf32, #tpu.memory_space<smem>>
    %62 = vector.broadcast %61 : f32 to vector<2x128xf32>
    %63 = arith.mulf %53, %62 : vector<2x128xf32>
    %64 = arith.addf %60, %63 : vector<2x128xf32>
    %c0_38 = arith.constant 0 : index
    %65 = memref.load %arg5[%c0_38] : memref<3xf32, #tpu.memory_space<smem>>
    %66 = vector.broadcast %65 : f32 to vector<2x128xf32>
    %67 = arith.addf %64, %66 : vector<2x128xf32>
    %c0_39 = arith.constant 0 : index
    %c0_40 = arith.constant 0 : index
    %c0_41 = arith.constant 0 : index
    %c0_42 = arith.constant 0 : index
    %68 = vector.load %arg7[%c0_39, %c0_40, %c0_41, %c0_42] : memref<1x3x2x128xf32, #tpu.memory_space<vmem>>, vector<1x1x2x128xf32>
    %69 = vector.shape_cast %68 : vector<1x1x2x128xf32> to vector<2x128xf32>
    %70 = vector.shape_cast %67 : vector<2x128xf32> to vector<1x1x2x128xf32>
    tpu.vector_store %arg7[%c0_39, %c0_40, %c0_41, %c0_42], %70 {strides = array<i32>} : memref<1x3x2x128xf32, #tpu.memory_space<vmem>>, vector<1x1x2x128xf32>,
    %c1_43 = arith.constant 1 : index
    %c0_44 = arith.constant 0 : index
    %71 = memref.load %arg4[%c1_43, %c0_44] : memref<3x3xf32, #tpu.memory_space<smem>>
    %72 = vector.broadcast %71 : f32 to vector<2x128xf32>
    %73 = arith.mulf %21, %72 : vector<2x128xf32>
    %c1_45 = arith.constant 1 : index
    %c1_46 = arith.constant 1 : index
    %74 = memref.load %arg4[%c1_45, %c1_46] : memref<3x3xf32, #tpu.memory_space<smem>>
    %75 = vector.broadcast %74 : f32 to vector<2x128xf32>
    %76 = arith.mulf %37, %75 : vector<2x128xf32>
    %77 = arith.addf %73, %76 : vector<2x128xf32>
    %c1_47 = arith.constant 1 : index
    %c2_48 = arith.constant 2 : index
    %78 = memref.load %arg4[%c1_47, %c2_48] : memref<3x3xf32, #tpu.memory_space<smem>>
    %79 = vector.broadcast %78 : f32 to vector<2x128xf32>
    %80 = arith.mulf %53, %79 : vector<2x128xf32>
    %81 = arith.addf %77, %80 : vector<2x128xf32>
    %c1_49 = arith.constant 1 : index
    %82 = memref.load %arg5[%c1_49] : memref<3xf32, #tpu.memory_space<smem>>
    %83 = vector.broadcast %82 : f32 to vector<2x128xf32>
    %84 = arith.addf %81, %83 : vector<2x128xf32>
    %c0_50 = arith.constant 0 : index
    %c1_51 = arith.constant 1 : index
    %c0_52 = arith.constant 0 : index
    %c0_53 = arith.constant 0 : index
    %85 = vector.load %arg7[%c0_50, %c1_51, %c0_52, %c0_53] : memref<1x3x2x128xf32, #tpu.memory_space<vmem>>, vector<1x1x2x128xf32>
    %86 = vector.shape_cast %85 : vector<1x1x2x128xf32> to vector<2x128xf32>
    %87 = vector.shape_cast %84 : vector<2x128xf32> to vector<1x1x2x128xf32>
    tpu.vector_store %arg7[%c0_50, %c1_51, %c0_52, %c0_53], %87 {strides = array<i32>} : memref<1x3x2x128xf32, #tpu.memory_space<vmem>>, vector<1x1x2x128xf32>,
    %c2_54 = arith.constant 2 : index
    %c0_55 = arith.constant 0 : index
    %88 = memref.load %arg4[%c2_54, %c0_55] : memref<3x3xf32, #tpu.memory_space<smem>>
    %89 = vector.broadcast %88 : f32 to vector<2x128xf32>
    %90 = arith.mulf %21, %89 : vector<2x128xf32>
    %c2_56 = arith.constant 2 : index
    %c1_57 = arith.constant 1 : index
    %91 = memref.load %arg4[%c2_56, %c1_57] : memref<3x3xf32, #tpu.memory_space<smem>>
    %92 = vector.broadcast %91 : f32 to vector<2x128xf32>
    %93 = arith.mulf %37, %92 : vector<2x128xf32>
    %94 = arith.addf %90, %93 : vector<2x128xf32>
    %c2_58 = arith.constant 2 : index
    %c2_59 = arith.constant 2 : index
    %95 = memref.load %arg4[%c2_58, %c2_59] : memref<3x3xf32, #tpu.memory_space<smem>>
    %96 = vector.broadcast %95 : f32 to vector<2x128xf32>
    %97 = arith.mulf %53, %96 : vector<2x128xf32>
    %98 = arith.addf %94, %97 : vector<2x128xf32>
    %c2_60 = arith.constant 2 : index
    %99 = memref.load %arg5[%c2_60] : memref<3xf32, #tpu.memory_space<smem>>
    %100 = vector.broadcast %99 : f32 to vector<2x128xf32>
    %101 = arith.addf %98, %100 : vector<2x128xf32>
    %c0_61 = arith.constant 0 : index
    %c2_62 = arith.constant 2 : index
    %c0_63 = arith.constant 0 : index
    %c0_64 = arith.constant 0 : index
    %102 = vector.load %arg7[%c0_61, %c2_62, %c0_63, %c0_64] : memref<1x3x2x128xf32, #tpu.memory_space<vmem>>, vector<1x1x2x128xf32>
    %103 = vector.shape_cast %102 : vector<1x1x2x128xf32> to vector<2x128xf32>
    %104 = vector.shape_cast %101 : vector<2x128xf32> to vector<1x1x2x128xf32>
    tpu.vector_store %arg7[%c0_61, %c2_62, %c0_63, %c0_64], %104 {strides = array<i32>} : memref<1x3x2x128xf32, #tpu.memory_space<vmem>>, vector<1x1x2x128xf32>,
    return
  }
  func.func @transform_0(%arg0: i32, %arg1: i32) -> (i32, i32) {
    %c0_i32 = arith.constant 0 : i32
    %c0_i32_0 = arith.constant 0 : i32
    %c0_i32_1 = arith.constant 0 : i32
    return %c0_i32, %c0_i32_0 : i32, i32
  }
  func.func @transform_1(%arg0: i32, %arg1: i32) -> i32 {
    %c0_i32 = arith.constant 0 : i32
    %c0_i32_0 = arith.constant 0 : i32
    return %c0_i32 : i32
  }
  func.func @transform_2(%arg0: i32, %arg1: i32) -> (i32, i32) {
    %c0_i32 = arith.constant 0 : i32
    %c0_i32_0 = arith.constant 0 : i32
    %c0_i32_1 = arith.constant 0 : i32
    return %c0_i32, %c0_i32_0 : i32, i32
  }
  func.func @transform_3(%arg0: i32, %arg1: i32) -> i32 {
    %c0_i32 = arith.constant 0 : i32
    %c0_i32_0 = arith.constant 0 : i32
    return %c0_i32 : i32
  }
  func.func @transform_4(%arg0: i32, %arg1: i32) -> (i32, i32, i32, i32) {
    %c0_i32 = arith.constant 0 : i32
    %c0_i32_0 = arith.constant 0 : i32
    %c0_i32_1 = arith.constant 0 : i32
    return %arg0, %c0_i32, %arg1, %c0_i32_0 : i32, i32, i32, i32
  }
  func.func @transform_5(%arg0: i32, %arg1: i32) -> (i32, i32, i32, i32) {
    %c0_i32 = arith.constant 0 : i32
    %c0_i32_0 = arith.constant 0 : i32
    %c0_i32_1 = arith.constant 0 : i32
    return %arg0, %c0_i32, %arg1, %c0_i32_0 : i32, i32, i32, i32
  }
}

</mosaic_0001>

<llo_original>
// kernel: tpu_custom_call.1
$region0: #{tpu_custom_call.1}
  #allocation0 [shape = 'u32[]', space=smem, size = 0x4, offset = 0x4, fixed_abs, tag = 'smem constant byte address 0x4 - core index']
  #allocation1 [shape = 'u32[144,128]{1,0:T(1,128)}', space=vmem, size = 0x12000, scoped, tag = 'internal scratch']
  %s0 = inlined_call_operand.hbm [shape: f32[3,3], index: 0, kind: input, shape index: {}]
  %s1 = inlined_call_operand.vmem [shape: f32[3], index: 1, kind: input, shape index: {}]
  %s2 = inlined_call_operand.hbm [shape: f32[3,3], index: 2, kind: input, shape index: {}]
  %s3 = inlined_call_operand.vmem [shape: f32[3], index: 3, kind: input, shape index: {}]
  %s4 = inlined_call_operand.vmem [shape: f32[2,3,2,128], index: 4, kind: input, shape index: {}]
  %s5 = inlined_call_operand.hbm [shape: f32[2,3,2,128], index: 5, kind: output, shape index: {}]
  %s6 = sld [smem:[#allocation0]]
  $region69: #{tpu_custom_call.1} parent=0
    _
  %s8 = ssub.s32 1, %s6
  %s9 = scalar_select 0, %s8, %s6
  $region1: #{tpu_custom_call.1} parent=0
    #allocation2 [shape = 'u8[2048]{0}', space=smem, size = 0x800, scoped, tag = 'input window, operand 0, single buffered']
    #allocation3 [shape = 's32[2]{0}', space=sflag, size = 0x8, scoped, tag = 'scoped memory for tpu_custom_call.1']
    #allocation4 [shape = 's32[2]{0}', space=sflag, size = 0x8, scoped, tag = 'scoped memory for tpu_custom_call.1']
    #allocation5 [shape = 's32[2]{0}', space=sflag, size = 0x8, scoped, tag = 'scoped memory for tpu_custom_call.1']
    #allocation6 [shape = 'u8[512]{0}', space=smem, size = 0x200, scoped, tag = 'input window, operand 1, single buffered']
    #allocation7 [shape = 'u8[2048]{0}', space=smem, size = 0x800, scoped, tag = 'input window, operand 2, single buffered']
    #allocation8 [shape = 's32[1]{0}', space=sflag, size = 0x4, scoped, tag = 'scoped memory for tpu_custom_call.1']
    #allocation9 [shape = 'u8[512]{0}', space=smem, size = 0x200, scoped, tag = 'input window, operand 3, single buffered']
    #allocation10 [shape = 's32[1]{0}', space=sflag, size = 0x4, scoped, tag = 'scoped memory for tpu_custom_call.1']
    #allocation11 [shape = 'u8[6144]{0}', space=vmem, size = 0x1800, scoped, tag = 'output window, operand 0']
    %10 = vsyncpa [#allocation4], 0
    %11 = vsyncpa [#allocation5], 0
    %12 = vsyncpa [#allocation8], 0
    %13 = vsyncpa [#allocation10], 0
    %14 = vsyncpa [#allocation3], 0
    %s15 = scalar_lea.sflag [#allocation3], 1
    %16 = vsyncpa %s15, 0
    loop: start=0, step=1, limit=4
    $region2: #{tpu_custom_call.1} parent=1 // loop_pre_header
      _
    $region3: #{tpu_custom_call.1} parent=1 // loop_header
      %s18 = sphi 0, %s22
      %p19 = scmp.ge.s32.totalorder %s18, 4
      %s25 = sphi 0, %s37
      %s26 = sphi 0, %s33
      %s27 = sphi 0, %s25
      %s28 = sphi 0, %s26
      %s29 = sphi 0, %s27
      %s30 = sphi 0, %s28
      %s38 = sphi 0, %s38
      %s40 = sphi 0, %s38
      %s41 = sphi 0, %s40
      %s55 = sphi 0, %s41
      %s59 = sphi 0, %s59
      %s61 = sphi 0, %s59
      %s62 = sphi 0, %s61
      %s76 = sphi 0, %s62
      %s80 = sphi 0, %s80
      %s82 = sphi 0, %s80
      %s83 = sphi 0, %s82
      %s97 = sphi 0, %s83
      %s101 = sphi 0, %s101
      %s103 = sphi 0, %s101
      %s104 = sphi 0, %s103
      %s118 = sphi 0, %s104
      %s126 = sphi 0, %s128
      %s129 = sphi 0, %s126
      %s130 = sphi 0, %s129
      %s146 = sphi 0, %s130
      %s154 = sphi 0, %s156
      %s157 = sphi 0, %s154
      %s158 = sphi 0, %s157
      %s174 = sphi 0, %s158
    $region4: #{tpu_custom_call.1} parent=1 // loop_header_branch
      %21 = sbr.rel (%p19) target = $region8
    $region5: #{tpu_custom_call.1} parent=1 // loop_body
      %s23 = ssub.s32 %s18, 1
      %s24 = ssub.s32 %s18, 2
      %s31 = sadd.s32 1, %s26
      %p32 = scmp.ge.s32.totalorder %s31, 1
      %s33 = scalar_select %p32, 0, %s31
      %s34 = sadd.s32 1, %s25
      %s35 = scalar_select %p32, %s34, %s25
      %p36 = scmp.ge.s32.totalorder %s35, 2
      %s37 = scalar_select %p36, 0, %s35
      %s39 = sadd.s32 %s38, 1
      %p42 = scmp.eq.s32.totalorder %s18, 1
      %p43 = scmp.ne.s32.totalorder %s38, %s40
      %p44 = scmp.eq.s32.totalorder %s18, 0
      %p45 = por %p43, %p44
      %p46 = scmp.ne.s32.totalorder %s38, %s40
      %p47 = scmp.eq.s32.totalorder %s23, 1
      %p48 = por %p46, %p47
      %p49 = scmp.ne.s32.totalorder %s40, %s41
      %p50 = scmp.eq.s32.totalorder %s23, 0
      %p51 = por %p49, %p50
      %p52 = scmp.ne.s32.totalorder %s40, %s41
      %p53 = scmp.eq.s32.totalorder %s24, 1
      %p54 = por %p52, %p53
      %p56 = scmp.ne.s32.totalorder %s41, %s55
      %p57 = scmp.eq.s32.totalorder %s24, 0
      %p58 = por %p56, %p57
      %s60 = sadd.s32 %s59, 1
      %p63 = scmp.eq.s32.totalorder %s18, 1
      %p64 = scmp.ne.s32.totalorder %s59, %s61
      %p65 = scmp.eq.s32.totalorder %s18, 0
      %p66 = por %p64, %p65
      %p67 = scmp.ne.s32.totalorder %s59, %s61
      %p68 = scmp.eq.s32.totalorder %s23, 1
      %p69 = por %p67, %p68
      %p70 = scmp.ne.s32.totalorder %s61, %s62
      %p71 = scmp.eq.s32.totalorder %s23, 0
      %p72 = por %p70, %p71
      %p73 = scmp.ne.s32.totalorder %s61, %s62
      %p74 = scmp.eq.s32.totalorder %s24, 1
      %p75 = por %p73, %p74
      %p77 = scmp.ne.s32.totalorder %s62, %s76
      %p78 = scmp.eq.s32.totalorder %s24, 0
      %p79 = por %p77, %p78
      %s81 = sadd.s32 %s80, 1
      %p84 = scmp.eq.s32.totalorder %s18, 1
      %p85 = scmp.ne.s32.totalorder %s80, %s82
      %p86 = scmp.eq.s32.totalorder %s18, 0
      %p87 = por %p85, %p86
      %p88 = scmp.ne.s32.totalorder %s80, %s82
      %p89 = scmp.eq.s32.totalorder %s23, 1
      %p90 = por %p88, %p89
      %p91 = scmp.ne.s32.totalorder %s82, %s83
      %p92 = scmp.eq.s32.totalorder %s23, 0
      %p93 = por %p91, %p92
      %p94 = scmp.ne.s32.totalorder %s82, %s83
      %p95 = scmp.eq.s32.totalorder %s24, 1
      %p96 = por %p94, %p95
      %p98 = scmp.ne.s32.totalorder %s83, %s97
      %p99 = scmp.eq.s32.totalorder %s24, 0
      %p100 = por %p98, %p99
      %s102 = sadd.s32 %s101, 1
      %p105 = scmp.eq.s32.totalorder %s18, 1
      %p106 = scmp.ne.s32.totalorder %s101, %s103
      %p107 = scmp.eq.s32.totalorder %s18, 0
      %p108 = por %p106, %p107
      %p109 = scmp.ne.s32.totalorder %s101, %s103
      %p110 = scmp.eq.s32.totalorder %s23, 1
      %p111 = por %p109, %p110
      %p112 = scmp.ne.s32.totalorder %s103, %s104
      %p113 = scmp.eq.s32.totalorder %s23, 0
      %p114 = por %p112, %p113
      %p115 = scmp.ne.s32.totalorder %s103, %s104
      %p116 = scmp.eq.s32.totalorder %s24, 1
      %p117 = por %p115, %p116
      %p119 = scmp.ne.s32.totalorder %s104, %s118
      %p120 = scmp.eq.s32.totalorder %s24, 0
      %p121 = por %p119, %p120
      %s122 = ssub.s32 %s25, %s37
      %s123 = ssub.s32 %s26, %s33
      %s124 = sor.u32 %s122, %s123
      %p125 = scmp.eq.s32.totalorder %s124, 0
      %s127 = sadd.s32 %s126, 1
      %s128 = scalar_select %p125, %s126, %s127
      %p131 = pneg %p125
      %p132 = scmp.eq.s32.totalorder %s18, 1
      %p133 = por %p131, %p132
      %p134 = scmp.ne.s32.totalorder %s126, %s129
      %p135 = scmp.eq.s32.totalorder %s18, 0
      %p136 = por %p134, %p135
      %p137 = scmp.ne.s32.totalorder %s126, %s129
      %p138 = scmp.eq.s32.totalorder %s23, 1
      %p139 = por %p137, %p138
      %p140 = scmp.ne.s32.totalorder %s129, %s130
      %p141 = scmp.eq.s32.totalorder %s23, 0
      %p142 = por %p140, %p141
      %p143 = scmp.ne.s32.totalorder %s129, %s130
      %p144 = scmp.eq.s32.totalorder %s24, 1
      %p145 = por %p143, %p144
      %p147 = scmp.ne.s32.totalorder %s130, %s146
      %p148 = scmp.eq.s32.totalorder %s24, 0
      %p149 = por %p147, %p148
      %s150 = ssub.s32 %s25, %s37
      %s151 = ssub.s32 %s26, %s33
      %s152 = sor.u32 %s150, %s151
      %p153 = scmp.eq.s32.totalorder %s152, 0
      %s155 = sadd.s32 %s154, 1
      %s156 = scalar_select %p153, %s154, %s155
      %p159 = pneg %p153
      %p160 = scmp.eq.s32.totalorder %s18, 1
      %p161 = por %p159, %p160
      %p162 = scmp.ne.s32.totalorder %s154, %s157
      %p163 = scmp.eq.s32.totalorder %s18, 0
      %p164 = por %p162, %p163
      %p165 = scmp.ne.s32.totalorder %s154, %s157
      %p166 = scmp.eq.s32.totalorder %s23, 1
      %p167 = por %p165, %p166
      %p168 = scmp.ne.s32.totalorder %s157, %s158
      %p169 = scmp.eq.s32.totalorder %s23, 0
      %p170 = por %p168, %p169
      %p171 = scmp.ne.s32.totalorder %s157, %s158
      %p172 = scmp.eq.s32.totalorder %s24, 1
      %p173 = por %p171, %p172
      %p175 = scmp.ne.s32.totalorder %s158, %s174
      %p176 = scmp.eq.s32.totalorder %s24, 0
      %p177 = por %p175, %p176
      %p178 = scmp.le.s32.totalorder 1, %s18
      %p179 = scmp.lt.s32.totalorder %s18, 3
      %p180 = pnand %p178, %p179
      %p181 = pneg %p180
      // Predicated region
      $region9: #{tpu_custom_call.1} parent=5 // pred_check
        _
      $region10: #{tpu_custom_call.1} parent=5 // pred_check_branch
        %183 = sbr.rel (%p180) target = $region12
      $region11: #{tpu_custom_call.1} parent=5 // pred_region
        %s184 = ssub.s32 %s18, 1
        // Predicated region
        $region13: #{tpu_custom_call.1} parent=11 // pred_check
          %p185 = pneg %p51
        $region14: #{tpu_custom_call.1} parent=11 // pred_check_branch
          %187 = sbr.rel (%p185) target = $region16
        $region15: #{tpu_custom_call.1} parent=11 // pred_region
          %s189 = ssub.s32 64, 64
          %190 = vsyncadd [#allocation4], %s189
          %193 = dma.hbm_to_smem %s0, 64, [#allocation2], [#allocation4]
        $region16: #{tpu_custom_call.1} parent=11 // pred_fallthru
          _
        // Predicated region
        $region17: #{tpu_custom_call.1} parent=11 // pred_check
          %p194 = pneg %p72
        $region18: #{tpu_custom_call.1} parent=11 // pred_check_branch
          %196 = sbr.rel (%p194) target = $region20
        $region19: #{tpu_custom_call.1} parent=11 // pred_region
          %s198 = ssub.s32 16, 16
          %199 = vsyncadd [#allocation5], %s198
          %s201 = sshll.u32 %s1, 4
          %s202 = int_to_ptr.vmem [resolvable:$true] %s201
          %204 = dma.vmem_to_smem %s202, 16, [#allocation6], [#allocation5]
        $region20: #{tpu_custom_call.1} parent=11 // pred_fallthru
          _
        // Predicated region
        $region21: #{tpu_custom_call.1} parent=11 // pred_check
          %p205 = pneg %p93
        $region22: #{tpu_custom_call.1} parent=11 // pred_check_branch
          %207 = sbr.rel (%p205) target = $region24
        $region23: #{tpu_custom_call.1} parent=11 // pred_region
          %s209 = ssub.s32 64, 64
          %210 = vsyncadd [#allocation8], %s209
          %213 = dma.hbm_to_smem %s2, 64, [#allocation7], [#allocation8]
        $region24: #{tpu_custom_call.1} parent=11 // pred_fallthru
          _
        // Predicated region
        $region25: #{tpu_custom_call.1} parent=11 // pred_check
          %p214 = pneg %p114
        $region26: #{tpu_custom_call.1} parent=11 // pred_check_branch
          %216 = sbr.rel (%p214) target = $region28
        $region27: #{tpu_custom_call.1} parent=11 // pred_region
          %s218 = ssub.s32 16, 16
          %219 = vsyncadd [#allocation10], %s218
          %s221 = sshll.u32 %s3, 4
          %s222 = int_to_ptr.vmem [resolvable:$true] %s221
          %224 = dma.vmem_to_smem %s222, 16, [#allocation9], [#allocation10]
        $region28: #{tpu_custom_call.1} parent=11 // pred_fallthru
          _
      $region12: #{tpu_custom_call.1} parent=5 // pred_fallthru
        _
      %p225 = scmp.lt.s32.totalorder %s18, 2
      // Predicated region
      $region29: #{tpu_custom_call.1} parent=5 // pred_check
        %p226 = pneg %p225
      $region30: #{tpu_custom_call.1} parent=5 // pred_check_branch
        %228 = sbr.rel (%p226) target = $region32
      $region31: #{tpu_custom_call.1} parent=5 // pred_region
        // Predicated region
        $region33: #{tpu_custom_call.1} parent=31 // pred_check
          %p229 = pneg %p136
        $region34: #{tpu_custom_call.1} parent=31 // pred_check_branch
          %231 = sbr.rel (%p229) target = $region36
        $region35: #{tpu_custom_call.1} parent=31 // pred_region
          %p232 = scmp.lt.s32.totalorder %s25, 1
          %s233 = scalar_select %p232, %s25, 1
          %p234 = scmp.lt.s32.totalorder %s26, 0
          %s235 = scalar_select %p234, %s26, 0
          %s236 = smul.addr %s233, 3
          %s237 = sadd.s32 %s235, %s236
          %s238 = smul.addr %s237, 2
          %s239 = scalar_lea.vmem %s4, %s238
        $region36: #{tpu_custom_call.1} parent=31 // pred_fallthru
          _
      $region32: #{tpu_custom_call.1} parent=5 // pred_fallthru
        _
      %p240 = scmp.le.s32.totalorder 1, %s18
      %p241 = scmp.lt.s32.totalorder %s18, 3
      %p242 = pnand %p240, %p241
      %p243 = pneg %p242
      // Predicated region
      $region37: #{tpu_custom_call.1} parent=5 // pred_check
        _
      $region38: #{tpu_custom_call.1} parent=5 // pred_check_branch
        %245 = sbr.rel (%p242) target = $region40
      $region39: #{tpu_custom_call.1} parent=5 // pred_region
        %s246 = ssub.s32 %s18, 1
        // Predicated region
        $region41: #{tpu_custom_call.1} parent=39 // pred_check
          %p247 = pneg %p51
        $region42: #{tpu_custom_call.1} parent=39 // pred_check_branch
          %249 = sbr.rel (%p247) target = $region44
        $region43: #{tpu_custom_call.1} parent=39 // pred_region
          %250 = dma.done [#allocation4], 64
        $region44: #{tpu_custom_call.1} parent=39 // pred_fallthru
          _
        // Predicated region
        $region45: #{tpu_custom_call.1} parent=39 // pred_check
          %p251 = pneg %p72
        $region46: #{tpu_custom_call.1} parent=39 // pred_check_branch
          %253 = sbr.rel (%p251) target = $region48
        $region47: #{tpu_custom_call.1} parent=39 // pred_region
          %254 = dma.done [#allocation5], 16
        $region48: #{tpu_custom_call.1} parent=39 // pred_fallthru
          _
        // Predicated region
        $region49: #{tpu_custom_call.1} parent=39 // pred_check
          %p255 = pneg %p93
        $region50: #{tpu_custom_call.1} parent=39 // pred_check_branch
          %257 = sbr.rel (%p255) target = $region52
        $region51: #{tpu_custom_call.1} parent=39 // pred_region
          %258 = dma.done [#allocation8], 64
        $region52: #{tpu_custom_call.1} parent=39 // pred_fallthru
          _
        // Predicated region
        $region53: #{tpu_custom_call.1} parent=39 // pred_check
          %p259 = pneg %p114
        $region54: #{tpu_custom_call.1} parent=39 // pred_check_branch
          %261 = sbr.rel (%p259) target = $region56
        $region55: #{tpu_custom_call.1} parent=39 // pred_region
          %262 = dma.done [#allocation10], 16
        $region56: #{tpu_custom_call.1} parent=39 // pred_fallthru
          _
        %263 = sfence
        %p264 = pneg %p51
        %p265 = pneg %p48
        %p266 = pneg %p72
        %p267 = pneg %p69
        %p268 = pneg %p93
        %p269 = pneg %p90
        %p270 = pneg %p114
        %p271 = pneg %p111
        %p272 = scmp.lt.s32.totalorder %s27, 1
        %s273 = scalar_select %p272, %s27, 1
        %p274 = scmp.lt.s32.totalorder %s28, 0
        %s275 = scalar_select %p274, %s28, 0
        %s276 = smul.addr %s273, 3
        %s277 = sadd.s32 %s275, %s276
        %s278 = smul.addr %s277, 2
        %s279 = scalar_lea.vmem %s4, %s278
        %p280 = pneg %p142
        %p281 = pneg %p139
        %p282 = pneg %p170
        %p283 = pneg %p167
        %s284 = sand.u32 %s157, 1
        %s285 = scalar_lea.sflag [#allocation3], %s284
        %s286 = sand.u32 %s157, 1
        %s287 = smul.addr %s286, 6
        %s288 = scalar_lea.vmem [#allocation11], %s287
        %p289 = scmp.lt.s32.totalorder %s27, 1
        %s290 = scalar_select %p289, %s27, 1
        %p291 = scmp.lt.s32.totalorder %s28, 0
        %s292 = scalar_select %p291, %s28, 0
        %s293 = smul.addr %s290, 3
        %s294 = sadd.s32 %s292, %s293
        %s295 = smul.addr %s294, 2
        %s296 = scalar_lea.vmem %s4, %s295
        %v297 = vld [vmem:[%s296] sm:$0x3]
        %s298 = scalar_lea.vmem %s296, 2
        %v299 = vld [vmem:[%s298] sm:$0x3]
        %s300 = scalar_lea.vmem %s296, 4
        %v301 = vld [vmem:[%s300] sm:$0x3]
        %s302 = sld [smem:[#allocation2]]
        %v303 = vstv %s302
        %v304 = vmul.f32 %v297, %v303
        %s305 = sld [smem:[#allocation2 + $0x80]]
        %v306 = vstv %s305
        %v307 = vmul.f32 %v299, %v306
        %v308 = vadd.f32 %v304, %v307
        %s309 = sld [smem:[#allocation2 + $0x100]]
        %v310 = vstv %s309
        %v311 = vmul.f32 %v301, %v310
        %v312 = vadd.f32 %v308, %v311
        %s313 = sld [smem:[#allocation6]]
        %v314 = vstv %s313
        %v315 = vadd.f32 %v312, %v314
        %v316 = vmax.f32 %v315, 0.0
        %s317 = sld [smem:[#allocation2 + $0x1]]
        %v318 = vstv %s317
        %v319 = vmul.f32 %v297, %v318
        %s320 = sld [smem:[#allocation2 + $0x81]]
        %v321 = vstv %s320
        %v322 = vmul.f32 %v299, %v321
        %v323 = vadd.f32 %v319, %v322
        %s324 = sld [smem:[#allocation2 + $0x101]]
        %v325 = vstv %s324
        %v326 = vmul.f32 %v301, %v325
        %v327 = vadd.f32 %v323, %v326
        %s328 = sld [smem:[#allocation6 + $0x1]]
        %v329 = vstv %s328
        %v330 = vadd.f32 %v327, %v329
        %v331 = vmax.f32 %v330, 0.0
        %s332 = sld [smem:[#allocation2 + $0x2]]
        %v333 = vstv %s332
        %v334 = vmul.f32 %v297, %v333
        %s335 = sld [smem:[#allocation2 + $0x82]]
        %v336 = vstv %s335
        %v337 = vmul.f32 %v299, %v336
        %v338 = vadd.f32 %v334, %v337
        %s339 = sld [smem:[#allocation2 + $0x102]]
        %v340 = vstv %s339
        %v341 = vmul.f32 %v301, %v340
        %v342 = vadd.f32 %v338, %v341
        %s343 = sld [smem:[#allocation6 + $0x2]]
        %v344 = vstv %s343
        %v345 = vadd.f32 %v342, %v344
        %v346 = vmax.f32 %v345, 0.0
        %s347 = sld [smem:[#allocation7]]
        %v348 = vstv %s347
        %v349 = vmul.f32 %v316, %v348
        %s350 = sld [smem:[#allocation7 + $0x1]]
        %v351 = vstv %s350
        %v352 = vmul.f32 %v331, %v351
        %v353 = vadd.f32 %v349, %v352
        %s354 = sld [smem:[#allocation7 + $0x2]]
        %v355 = vstv %s354
        %v356 = vmul.f32 %v346, %v355
        %v357 = vadd.f32 %v353, %v356
        %s358 = sld [smem:[#allocation9]]
        %v359 = vstv %s358
        %v360 = vadd.f32 %v357, %v359
        %361 = vst [vmem:[%s288] sm:$0x3] %v360
        %s362 = sld [smem:[#allocation7 + $0x80]]
        %v363 = vstv %s362
        %v364 = vmul.f32 %v316, %v363
        %s365 = sld [smem:[#allocation7 + $0x81]]
        %v366 = vstv %s365
        %v367 = vmul.f32 %v331, %v366
        %v368 = vadd.f32 %v364, %v367
        %s369 = sld [smem:[#allocation7 + $0x82]]
        %v370 = vstv %s369
        %v371 = vmul.f32 %v346, %v370
        %v372 = vadd.f32 %v368, %v371
        %s373 = sld [smem:[#allocation9 + $0x1]]
        %v374 = vstv %s373
        %v375 = vadd.f32 %v372, %v374
        %s376 = scalar_lea.vmem %s288, 2 [#allocation11]
        %377 = vst [vmem:[%s376] sm:$0x3] %v375
        %s378 = sld [smem:[#allocation7 + $0x100]]
        %v379 = vstv %s378
        %v380 = vmul.f32 %v316, %v379
        %s381 = sld [smem:[#allocation7 + $0x101]]
        %v382 = vstv %s381
        %v383 = vmul.f32 %v331, %v382
        %v384 = vadd.f32 %v380, %v383
        %s385 = sld [smem:[#allocation7 + $0x102]]
        %v386 = vstv %s385
        %v387 = vmul.f32 %v346, %v386
        %v388 = vadd.f32 %v384, %v387
        %s389 = sld [smem:[#allocation9 + $0x2]]
        %v390 = vstv %s389
        %v391 = vadd.f32 %v388, %v390
        %s392 = scalar_lea.vmem %s288, 4 [#allocation11]
        %393 = vst [vmem:[%s392] sm:$0x3] %v391
        %s394 = sand.u32 %s157, 1
        %s395 = scalar_lea.sflag [#allocation3], %s394
        %s396 = sand.u32 %s157, 1
        %s397 = smul.addr %s396, 6
        %s398 = scalar_lea.vmem [#allocation11], %s397
        // Predicated region
        $region57: #{tpu_custom_call.1} parent=39 // pred_check
          %p399 = pneg %p167
        $region58: #{tpu_custom_call.1} parent=39 // pred_check_branch
          %401 = sbr.rel (%p399) target = $region60
        $region59: #{tpu_custom_call.1} parent=39 // pred_region
          %s403 = ssub.s32 96, 96
          %404 = vsyncadd %s395, %s403
          %s405 = smul.addr %s27, 3
          %s406 = sadd.s32 %s28, %s405
          %s407 = smul.addr %s406, 32
          %s408 = scalar_lea.hbm %s5, %s407
          %s409 = sshll.u32 %s398, 4
          %s410 = int_to_ptr.vmem [resolvable:$true] %s409
          %415 = dma.vmem_to_hbm [thread:$0]  %s410, 96, %s408, %s395, 32, 32, 2
        $region60: #{tpu_custom_call.1} parent=39 // pred_fallthru
          _
      $region40: #{tpu_custom_call.1} parent=5 // pred_fallthru
        _
      %p416 = scmp.le.s32.totalorder 2, %s18
      // Predicated region
      $region61: #{tpu_custom_call.1} parent=5 // pred_check
        %p417 = pneg %p416
      $region62: #{tpu_custom_call.1} parent=5 // pred_check_branch
        %419 = sbr.rel (%p417) target = $region64
      $region63: #{tpu_custom_call.1} parent=5 // pred_region
        %s420 = ssub.s32 %s18, 2
        // Predicated region
        $region65: #{tpu_custom_call.1} parent=63 // pred_check
          %p421 = pneg %p173
        $region66: #{tpu_custom_call.1} parent=63 // pred_check_branch
          %423 = sbr.rel (%p421) target = $region68
        $region67: #{tpu_custom_call.1} parent=63 // pred_region
          %s424 = sand.u32 %s158, 1
          %s425 = scalar_lea.sflag [#allocation3], %s424
          %s426 = sand.u32 %s158, 1
          %s427 = smul.addr %s426, 6
          %s428 = scalar_lea.vmem [#allocation11], %s427
          %429 = dma.done %s425, 96
        $region68: #{tpu_custom_call.1} parent=63 // pred_fallthru
          _
      $region64: #{tpu_custom_call.1} parent=5 // pred_fallthru
        _
    $region6: #{tpu_custom_call.1} parent=1 // loop_footer
      %s22 = sadd.s32 1, %s18
    $region7: #{tpu_custom_call.1} parent=1 // loop_footer_branch
      %17 = sbr.rel target = $region3
    $region8: #{tpu_custom_call.1} parent=1 // loop_exit
      _
    %430 = vsyncpa [#allocation3], 1
    %s431 = scalar_lea.sflag [#allocation3], 1
    %432 = vsyncpa %s431, 1
    %433 = vsyncpa [#allocation4], 1
    %s434 = scalar_lea.sflag [#allocation4], 1
    %435 = vsyncpa %s434, 1
    %436 = vsyncpa [#allocation8], 1
    %437 = vsyncpa [#allocation5], 1
    %s438 = scalar_lea.sflag [#allocation5], 1
    %439 = vsyncpa %s438, 1
    %440 = vsyncpa [#allocation10], 1

</llo_original>
